<compile_context>
chip_gen: v7x
topology: tpu7x:2x2x1
jax: 0.10.0
libtpu: 0.0.40
codegen_flags: <defaults>
</compile_context>

<pallas_src>
import functools

import jax
import jax.numpy as jnp
from jax import lax
from jax.experimental import pallas as pl
from jax.experimental.pallas import tpu as pltpu


_TARGET_TILE_BYTES = 4 * 1024 * 1024     # logits bytes per grid step (per buffer)
_MAX_BLOCK_SAMPLES = 512 * 1024          # caps f32 intermediates per grid step
_LANE_DENSE_MAX_C = 16                   # unroll-over-classes threshold
_VMEM_LIMIT = 48 * 1024 * 1024           # safe on v7x (64 MiB/TC) and below


def _round_up(x, m):
    return ((x + m - 1) // m) * m


def _focal_pow(omp, gamma):
    """(1 - p)**gamma; integer gamma -> repeated VPU multiplies (no EUP power)."""
    g = float(gamma)
    if g == int(g) and 0 <= int(g) <= 8:
        k = int(g)
        if k == 0:
            return jnp.ones_like(omp)
        out = omp
        for _ in range(k - 1):
            out = out * omp
        return out
    return jnp.power(omp, jnp.float32(g))


# ----------------------------------------------------------------------------
# Lane-dense path (small C): samples on (sublane, lane), class axis unrolled.
# ----------------------------------------------------------------------------
def _focal_lane_kernel(gamma, n_valid, sub, lane, tiles_per_split, need_mask, C,
                       x_ref, t_ref, a_ref, o_ref, acc_ref):
    j = pl.program_id(1)

    @pl.when(j == 0)
    def _init():
        acc_ref[...] = jnp.zeros_like(acc_ref)

    t = t_ref[...]                                           # (SUB, LANE) int32
    a = a_ref[...]                                           # (C, LANE)   f32
    xs = [x_ref[c].astype(jnp.float32) for c in range(C)]    # C x (SUB, LANE)

    # Stable log-sum-exp over the (statically unrolled) class axis.
    m = xs[0]
    for c in range(1, C):
        m = jnp.maximum(m, xs[c])
    ssum = jnp.exp(xs[0] - m)
    for c in range(1, C):
        ssum = ssum + jnp.exp(xs[c] - m)
    lse = jnp.log(ssum)

    # Target logit / per-sample alpha via predicated selects (no float one-hot).
    x_t = xs[0]
    alpha_t = a[0:1, :]
    for c in range(1, C):
        sel = t == c
        x_t = jnp.where(sel, xs[c], x_t)
        alpha_t = jnp.where(sel, a[c:c + 1, :], alpha_t)

    log_p = x_t - m - lse                                    # log softmax[target]
    probs = jnp.exp(log_p)
    focal = _focal_pow(1.0 - probs, gamma)
    row_loss = (-alpha_t) * focal * log_p                    # (SUB, LANE)

    if need_mask:
        flat_tile = pl.program_id(0) * tiles_per_split + j
        base = flat_tile * (sub * lane)
        row = lax.broadcasted_iota(jnp.int32, (sub, lane), 0)
        col = lax.broadcasted_iota(jnp.int32, (sub, lane), 1)
        row_loss = jnp.where(base + row * lane + col < n_valid, row_loss, 0.0)

    # Pure VALU accumulate each step; single XLU reduce only in the finalize.
    acc_ref[...] += row_loss

    @pl.when(j == pl.num_programs(1) - 1)
    def _finalize():
        o_ref[...] = jnp.zeros_like(o_ref) + jnp.sum(acc_ref[...])


def _focal_loss_lane_dense(x, t, a, gamma, lane, sub, n_splits):
    N, C = x.shape
    itemsize = jnp.dtype(x.dtype).itemsize

    if lane is None:
        lane = 512 if N >= 8 * 512 else 128
    assert lane % 128 == 0 and lane > 0

    m_raw = pl.cdiv(N, lane)
    if sub is None:
        sub = _TARGET_TILE_BYTES // max(C * lane * itemsize, 1)
        sub = min(sub, _MAX_BLOCK_SAMPLES // lane)
        sub = max(8, (sub // 8) * 8)
    assert sub % 8 == 0 and sub > 0
    sub = min(sub, _round_up(m_raw, 8))

    n_blk = pl.cdiv(m_raw, sub)
    if n_splits is None:
        n_splits = 2                      # v7x: one per TensorCore; elsewhere a loop
    n_splits = n_splits if n_blk >= n_splits else 1
    n_blk = _round_up(n_blk, n_splits)
    tiles_per_split = n_blk // n_splits
    m_total = n_blk * sub
    n_pad = m_total * lane
    need_mask = n_pad != N

    x_pad = x
    t_pad = t.astype(jnp.int32)
    if n_pad != N:
        x_pad = jnp.pad(x_pad, ((0, n_pad - N), (0, 0)))
        t_pad = jnp.pad(t_pad, ((0, n_pad - N),))
    # Lane-dense layout: samples fill (sublane, lane); class axis leading (untiled).
    xr = x_pad.T.reshape(C, m_total, lane)
    tr = t_pad.reshape(m_total, lane)
    ab = jnp.broadcast_to(a.astype(jnp.float32).reshape(C, 1), (C, lane))

    kernel = functools.partial(_focal_lane_kernel, float(gamma), N, sub, lane,
                               tiles_per_split, need_mask, C)

    cost = pl.CostEstimate(
        flops=int(n_pad * (6 * C + 14)),
        transcendentals=int(n_pad * (C + 2)),
        bytes_accessed=int(n_pad * (C * itemsize + 4) + C * lane * 4
                           + n_splits * 128 * 4),
    )

    out = pl.pallas_call(
        kernel,
        out_shape=jax.ShapeDtypeStruct((1, 128 * n_splits), jnp.float32),
        grid_spec=pltpu.PrefetchScalarGridSpec(
            num_scalar_prefetch=0,
            grid=(n_splits, tiles_per_split),
            in_specs=[
                pl.BlockSpec((C, sub, lane),
                             lambda s, j: (0, s * tiles_per_split + j, 0)),
                pl.BlockSpec((sub, lane),
                             lambda s, j: (s * tiles_per_split + j, 0)),
                pl.BlockSpec((C, lane), lambda s, j: (0, 0)),      # alpha, replicated
            ],
            out_specs=pl.BlockSpec((1, 128), lambda s, j: (0, s)), # per-split slot
            scratch_shapes=[pltpu.VMEM((sub, lane), jnp.float32)],
        ),
        compiler_params=pltpu.CompilerParams(
            dimension_semantics=("parallel", "arbitrary"),
            vmem_limit_bytes=_VMEM_LIMIT,
        ),
        cost_estimate=cost,
    )(xr, tr, ab)
    return out.reshape(n_splits, 128)[:, 0]                       # per-split partials


# ----------------------------------------------------------------------------
# Large-C fallback: class axis on lanes (as before), improved per review.
# ----------------------------------------------------------------------------
def _focal_rowmajor_kernel(gamma, n_valid, tile_n, need_mask,
                           x_ref, t_ref, a_ref, o_ref, acc_ref):
    i = pl.program_id(0)

    @pl.when(i == 0)
    def _init():
        acc_ref[...] = jnp.zeros_like(acc_ref)

    x = x_ref[...].astype(jnp.float32)                   # (TILE_N, C)
    t = t_ref[...]                                       # (TILE_N, 1) int32
    a = a_ref[...].astype(jnp.float32)                   # (1, C)
    tn, C = x.shape

    m = jnp.max(x, axis=1, keepdims=True)
    lse = jnp.log(jnp.sum(jnp.exp(x - m), axis=1, keepdims=True))

    onehot = lax.broadcasted_iota(jnp.int32, (tn, C), 1) == t
    x_t = jnp.sum(jnp.where(onehot, x, 0.0), axis=1, keepdims=True)
    alpha_t = jnp.sum(jnp.where(onehot, a, 0.0), axis=1, keepdims=True)

    log_p = x_t - m - lse
    probs = jnp.exp(log_p)
    focal = _focal_pow(1.0 - probs, gamma)
    row_loss = (-alpha_t) * focal * log_p                # (TILE_N, 1)

    if need_mask:
        row_ids = i * tile_n + lax.broadcasted_iota(jnp.int32, (tn, 1), 0)
        row_loss = jnp.where(row_ids < n_valid, row_loss, 0.0)

    acc_ref[...] += row_loss

    @pl.when(i == pl.num_programs(0) - 1)
    def _finalize():
        o_ref[...] = jnp.zeros_like(o_ref) + jnp.sum(acc_ref[...])


def _focal_loss_rowmajor(x, t, a, gamma, tile_n):
    N, C = x.shape
    itemsize = jnp.dtype(x.dtype).itemsize
    if tile_n is None:
        cap = _TARGET_TILE_BYTES // max(C * itemsize, 1)
        cap = max(8, min(2048, (cap // 8) * 8))
        if N % 8 == 0:
            tile_n = min(cap, N)
        elif N <= cap:
            tile_n = N
        else:
            tile_n = cap
    assert tile_n == N or tile_n % 8 == 0, "tile_n must equal N or be a multiple of 8"
    n_tiles = pl.cdiv(N, tile_n)
    need_mask = (N % tile_n) != 0

    t2d = t.astype(jnp.int32).reshape(N, 1)
    a2d = a.astype(jnp.float32).reshape(1, C)

    kernel = functools.partial(_focal_rowmajor_kernel, float(gamma), N, tile_n,
                               need_mask)

    cost = pl.CostEstimate(
        flops=int(10 * N * C + 16 * N),
        transcendentals=int(N * C + 2 * N),
        bytes_accessed=int(N * C * itemsize + N * 4 + C * 4 + 4),
    )

    out = pl.pallas_call(
        kernel,
        out_shape=jax.ShapeDtypeStruct((1, 1), jnp.float32),
        grid_spec=pltpu.PrefetchScalarGridSpec(
            num_scalar_prefetch=0,
            grid=(n_tiles,),
            in_specs=[
                pl.BlockSpec((tile_n, C), lambda i: (i, 0)),   # logits, native dtype
                pl.BlockSpec((tile_n, 1), lambda i: (i, 0)),   # targets
                pl.BlockSpec((1, C), lambda i: (0, 0)),        # alpha (replicated)
            ],
            out_specs=pl.BlockSpec((1, 1), lambda i: (0, 0)),
            scratch_shapes=[pltpu.VMEM((tile_n, 1), jnp.float32)],
        ),
        compiler_params=pltpu.CompilerParams(
            dimension_semantics=("arbitrary",),
            vmem_limit_bytes=_VMEM_LIMIT,
        ),
        cost_estimate=cost,
    )(x, t2d, a2d)
    return out.reshape(1)


# ----------------------------------------------------------------------------
# Public entry point.
# ----------------------------------------------------------------------------
def focal_loss(inputs, targets, alpha, gamma=2.0, size_average=True,
               lane=None, sub=None, n_splits=None, tile_n=None):
    """Focal loss matching FocalLoss.forward.

    inputs: (N, C) logits (any float dtype); targets: (N,) int; alpha: (C,) float.
    """
    N, C = inputs.shape
    if C <= _LANE_DENSE_MAX_C and tile_n is None:
        partials = _focal_loss_lane_dense(inputs, targets, alpha, gamma,
                                          lane, sub, n_splits)
    else:
        partials = _focal_loss_rowmajor(inputs, targets, alpha, gamma, tile_n)
    total = jnp.sum(partials)
    return total / N if size_average else total


if __name__ == "__main__":
    # Deterministic params matching FocalLoss.__init__(class_num=2, alpha=None).
    class_num = 2
    alpha = jnp.full((class_num,), 0.25, dtype=jnp.float32)
    alpha = alpha.at[0].set(1.0 - 0.25)                  # alpha = [0.75, 0.25]
    gamma = 2.0

    def ref_loss(x, t, a, g, size_average=True):
        P = jax.nn.softmax(x.astype(jnp.float32), axis=1)
        p = jnp.take_along_axis(P, t[:, None], axis=1)[:, 0]
        at = a[t]
        bl = -at * (1.0 - p) ** g * jnp.log(p)
        return jnp.mean(bl) if size_average else jnp.sum(bl)

    key = jax.random.PRNGKey(0)
    k1, k2, k3, k4, k5, k6 = jax.random.split(key, 6)

    # Case 1: module-default shape (N=8, C=2) -> lane-dense path, single tile.
    N1 = 8
    x1 = jax.random.normal(k1, (N1, class_num), dtype=jnp.float32)
    t1 = jax.random.randint(k2, (N1,), 0, class_num, dtype=jnp.int32)
    loss1 = jax.block_until_ready(focal_loss(x1, t1, alpha, gamma=gamma))
    ref1 = ref_loss(x1, t1, alpha, gamma)
    assert jnp.allclose(loss1, ref1, rtol=2e-5, atol=1e-6), (loss1, ref1)
    loss1s = jax.block_until_ready(
        focal_loss(x1, t1, alpha, gamma=gamma, size_average=False))
    ref1s = ref_loss(x1, t1, alpha, gamma, size_average=False)
    assert jnp.allclose(loss1s, ref1s, rtol=2e-5, atol=1e-6), (loss1s, ref1s)

    # Case 2: lane-dense path with multi-tile accumulation, a 2-way "parallel"
    # split (per-split partials) and padded trailing samples.
    N2 = 2100
    x2 = jax.random.normal(k3, (N2, class_num), dtype=jnp.float32)
    t2 = jax.random.randint(k4, (N2,), 0, class_num, dtype=jnp.int32)
    loss2 = jax.block_until_ready(
        focal_loss(x2, t2, alpha, gamma=gamma, lane=128, sub=8, n_splits=2))
    ref2 = ref_loss(x2, t2, alpha, gamma)
    assert jnp.allclose(loss2, ref2, rtol=2e-5, atol=1e-6), (loss2, ref2)

    # Case 3: large-C fallback (class-on-lane) with a partial last tile.
    C3, N3 = 40, 100
    alpha3 = jnp.full((C3,), 0.25, dtype=jnp.float32).at[0].set(0.75)
    x3 = jax.random.normal(k5, (N3, C3), dtype=jnp.float32)
    t3 = jax.random.randint(k6, (N3,), 0, C3, dtype=jnp.int32)
    loss3 = jax.block_until_ready(focal_loss(x3, t3, alpha3, gamma=gamma, tile_n=32))
    ref3 = ref_loss(x3, t3, alpha3, gamma)
    assert jnp.allclose(loss3, ref3, rtol=2e-5, atol=1e-6), (loss3, ref3)

    print("KERNEL_OK")
</pallas_src>

<mosaic_0001>
module attributes {stable_mosaic.version = 11 : i64} {
  func.func @_focal_lane_kernel(%arg0: i32, %arg1: i32, %arg2: memref<2x8x128xf32, #tpu.memory_space<vmem>>, %arg3: memref<8x128xi32, #tpu.memory_space<vmem>>, %arg4: memref<2x128xf32, #tpu.memory_space<vmem>>, %arg5: memref<1x128xf32, #tpu.memory_space<vmem>>, %arg6: memref<8x128xf32, #tpu.memory_space<vmem>>) attributes {dimension_semantics = [#tpu.dimension_semantics<parallel>, #tpu.dimension_semantics<arbitrary>], iteration_bounds = array<i64: 1, 1>, scalar_prefetch = 0 : i64, scratch_operands = 1 : i64, tpu.core_type = #tpu.core_type<tc>, window_params = [{transform_indices = @transform_0, window_bounds = array<i64: 2, 8, 128>}, {transform_indices = @transform_1, window_bounds = array<i64: 8, 128>}, {pipeline_mode = #tpu.pipeline_mode<synchronous>, transform_indices = @transform_2, window_bounds = array<i64: 2, 128>}, {transform_indices = @transform_3, window_bounds = array<i64: 1, 128>}]} {
    %c0_i32 = arith.constant 0 : i32
    %0 = arith.cmpi eq, %arg1, %c0_i32 : i32
    %1 = arith.extui %0 : i1 to i32
    %c0_i32_0 = arith.constant 0 : i32
    %2 = arith.cmpi ne, %1, %c0_i32_0 : i32
    scf.if %2 {
      %cst_18 = arith.constant 0.000000e+00 : f32
      %56 = vector.broadcast %cst_18 : f32 to vector<8x128xf32>
      %c0_19 = arith.constant 0 : index
      %c0_20 = arith.constant 0 : index
      %57 = vector.load %arg6[%c0_19, %c0_20] : memref<8x128xf32, #tpu.memory_space<vmem>>, vector<8x128xf32>
      tpu.vector_store %arg6[%c0_19, %c0_20], %56 {strides = array<i32>} : memref<8x128xf32, #tpu.memory_space<vmem>>, vector<8x128xf32>,
    } else {
    }
    %c0 = arith.constant 0 : index
    %c0_1 = arith.constant 0 : index
    %3 = vector.load %arg3[%c0, %c0_1] : memref<8x128xi32, #tpu.memory_space<vmem>>, vector<8x128xi32>
    %c0_2 = arith.constant 0 : index
    %c0_3 = arith.constant 0 : index
    %4 = vector.load %arg4[%c0_2, %c0_3] : memref<2x128xf32, #tpu.memory_space<vmem>>, vector<2x128xf32>
    %c0_4 = arith.constant 0 : index
    %c0_5 = arith.constant 0 : index
    %c0_6 = arith.constant 0 : index
    %5 = vector.load %arg2[%c0_4, %c0_5, %c0_6] : memref<2x8x128xf32, #tpu.memory_space<vmem>>, vector<1x8x128xf32>
    %6 = vector.shape_cast %5 : vector<1x8x128xf32> to vector<8x128xf32>
    %c1 = arith.constant 1 : index
    %c0_7 = arith.constant 0 : index
    %c0_8 = arith.constant 0 : index
    %7 = vector.load %arg2[%c1, %c0_7, %c0_8] : memref<2x8x128xf32, #tpu.memory_space<vmem>>, vector<1x8x128xf32>
    %8 = vector.shape_cast %7 : vector<1x8x128xf32> to vector<8x128xf32>
    %9 = arith.maximumf %6, %8 : vector<8x128xf32>
    %10 = arith.subf %6, %9 : vector<8x128xf32>
    %11 = math.exp %10 : vector<8x128xf32>
    %12 = arith.subf %8, %9 : vector<8x128xf32>
    %13 = math.exp %12 : vector<8x128xf32>
    %14 = arith.addf %11, %13 : vector<8x128xf32>
    %15 = math.log %14 : vector<8x128xf32>
    %16 = vector.extract_strided_slice %4 {offsets = [0, 0], sizes = [1, 128], strides = [1, 1]} : vector<2x128xf32> to vector<1x128xf32>
    %c1_i32 = arith.constant 1 : i32
    %17 = vector.broadcast %c1_i32 : i32 to vector<8x128xi32>
    %18 = arith.cmpi eq, %3, %17 : vector<8x128xi32>
    %19 = arith.select %18, %8, %6 : vector<8x128xi1>, vector<8x128xf32>
    %20 = vector.extract_strided_slice %4 {offsets = [1, 0], sizes = [1, 128], strides = [1, 1]} : vector<2x128xf32> to vector<1x128xf32>
    %21 = vector.shape_cast %20 : vector<1x128xf32> to vector<1x128xf32>
    %22 = vector.broadcast %21 : vector<1x128xf32> to vector<8x128xf32>
    %23 = vector.shape_cast %16 : vector<1x128xf32> to vector<1x128xf32>
    %24 = vector.broadcast %23 : vector<1x128xf32> to vector<8x128xf32>
    %25 = arith.select %18, %22, %24 : vector<8x128xi1>, vector<8x128xf32>
    %26 = arith.subf %19, %9 : vector<8x128xf32>
    %27 = arith.subf %26, %15 : vector<8x128xf32>
    %28 = math.exp %27 : vector<8x128xf32>
    %cst = arith.constant 1.000000e+00 : f32
    %29 = vector.broadcast %cst : f32 to vector<8x128xf32>
    %30 = arith.subf %29, %28 : vector<8x128xf32>
    %31 = arith.mulf %30, %30 : vector<8x128xf32>
    %cst_9 = arith.constant 0.000000e+00 : f32
    %32 = vector.broadcast %cst_9 : f32 to vector<8x128xf32>
    %33 = arith.subf %32, %25 : vector<8x128xf32>
    %34 = arith.mulf %33, %31 : vector<8x128xf32>
    %35 = arith.mulf %34, %27 : vector<8x128xf32>
    %c1_i32_10 = arith.constant 1 : i32
    %36 = arith.muli %arg0, %c1_i32_10 : i32
    %37 = arith.addi %36, %arg1 : i32
    %c1024_i32 = arith.constant 1024 : i32
    %38 = arith.muli %37, %c1024_i32 : i32
    %39 = tpu.iota {dimensions = array<i32: 0>} : vector<8x128xi32>
    %40 = tpu.iota {dimensions = array<i32: 1>} : vector<8x128xi32>
    %c128_i32 = arith.constant 128 : i32
    %41 = vector.broadcast %c128_i32 : i32 to vector<8x128xi32>
    %42 = arith.muli %39, %41 : vector<8x128xi32>
    %43 = vector.broadcast %38 : i32 to vector<8x128xi32>
    %44 = arith.addi %43, %42 : vector<8x128xi32>
    %45 = arith.addi %44, %40 : vector<8x128xi32>
    %c8_i32 = arith.constant 8 : i32
    %46 = vector.broadcast %c8_i32 : i32 to vector<8x128xi32>
    %47 = arith.cmpi slt, %45, %46 : vector<8x128xi32>
    %cst_11 = arith.constant 0.000000e+00 : f32
    %48 = vector.broadcast %cst_11 : f32 to vector<8x128xf32>
    %49 = arith.select %47, %35, %48 : vector<8x128xi1>, vector<8x128xf32>
    %c0_12 = arith.constant 0 : index
    %c0_13 = arith.constant 0 : index
    %50 = vector.load %arg6[%c0_12, %c0_13] : memref<8x128xf32, #tpu.memory_space<vmem>>, vector<8x128xf32>
    %51 = arith.addf %50, %49 : vector<8x128xf32>
    %c0_14 = arith.constant 0 : index
    %c0_15 = arith.constant 0 : index
    %52 = vector.load %arg6[%c0_14, %c0_15] : memref<8x128xf32, #tpu.memory_space<vmem>>, vector<8x128xf32>
    tpu.vector_store %arg6[%c0_14, %c0_15], %51 {strides = array<i32>} : memref<8x128xf32, #tpu.memory_space<vmem>>, vector<8x128xf32>,
    %c0_i32_16 = arith.constant 0 : i32
    %53 = arith.cmpi eq, %arg1, %c0_i32_16 : i32
    %54 = arith.extui %53 : i1 to i32
    %c0_i32_17 = arith.constant 0 : i32
    %55 = arith.cmpi ne, %54, %c0_i32_17 : i32
    scf.if %55 {
      %cst_18 = arith.constant 0.000000e+00 : f32
      %56 = vector.broadcast %cst_18 : f32 to vector<1x128xf32>
      %c0_19 = arith.constant 0 : index
      %c0_20 = arith.constant 0 : index
      %57 = vector.load %arg6[%c0_19, %c0_20] : memref<8x128xf32, #tpu.memory_space<vmem>>, vector<8x128xf32>
      %58 = vector.shape_cast %57 : vector<8x128xf32> to vector<1x8x128xf32>
      %cst_21 = arith.constant dense<0.000000e+00> : vector<1xf32>
      %59 = vector.multi_reduction <add>, %58, %cst_21 [1, 2] : vector<1x8x128xf32> to vector<1xf32>
      %60 = vector.shape_cast %59 : vector<1xf32> to vector<1x1x1xf32>
      %61 = vector.extract %60[0, 0, 0] : f32 from vector<1x1x1xf32>
      %62 = vector.broadcast %61 : f32 to vector<1x128xf32>
      %63 = arith.addf %56, %62 : vector<1x128xf32>
      %c0_22 = arith.constant 0 : index
      %c0_23 = arith.constant 0 : index
      %64 = vector.load %arg5[%c0_22, %c0_23] : memref<1x128xf32, #tpu.memory_space<vmem>>, vector<1x128xf32>
      tpu.vector_store %arg5[%c0_22, %c0_23], %63 {strides = array<i32>} : memref<1x128xf32, #tpu.memory_space<vmem>>, vector<1x128xf32>,
    } else {
    }
    return
  }
  func.func @transform_0(%arg0: i32, %arg1: i32) -> (i32, i32, i32) {
    %c1_i32 = arith.constant 1 : i32
    %0 = arith.muli %arg0, %c1_i32 : i32
    %1 = arith.addi %0, %arg1 : i32
    %c0_i32 = arith.constant 0 : i32
    %c0_i32_0 = arith.constant 0 : i32
    %c0_i32_1 = arith.constant 0 : i32
    return %c0_i32, %1, %c0_i32_0 : i32, i32, i32
  }
  func.func @transform_1(%arg0: i32, %arg1: i32) -> (i32, i32) {
    %c1_i32 = arith.constant 1 : i32
    %0 = arith.muli %arg0, %c1_i32 : i32
    %1 = arith.addi %0, %arg1 : i32
    %c0_i32 = arith.constant 0 : i32
    %c0_i32_0 = arith.constant 0 : i32
    return %1, %c0_i32 : i32, i32
  }
  func.func @transform_2(%arg0: i32, %arg1: i32) -> (i32, i32) {
    %c0_i32 = arith.constant 0 : i32
    %c0_i32_0 = arith.constant 0 : i32
    %c0_i32_1 = arith.constant 0 : i32
    return %c0_i32, %c0_i32_0 : i32, i32
  }
  func.func @transform_3(%arg0: i32, %arg1: i32) -> (i32, i32) {
    %c0_i32 = arith.constant 0 : i32
    %c0_i32_0 = arith.constant 0 : i32
    return %c0_i32, %arg0 : i32, i32
  }
}

</mosaic_0001>

<llo_original>
// kernel: tpu_custom_call.1
$region0: #{tpu_custom_call.1}
  #allocation0 [shape = 'u32[]', space=smem, size = 0x4, offset = 0x4, fixed_abs, tag = 'smem constant byte address 0x4 - core index']
  #allocation1 [shape = 'u32[144,128]{1,0:T(1,128)}', space=vmem, size = 0x12000, scoped, tag = 'internal scratch']
  #allocation2 [shape = 'f32[8,128]{1,0:T(8,128)}', space=vmem, size = 0x1000, scoped, tag = 'scratch operand']
  %s0 = inlined_call_operand.hbm [shape: f32[2,8,128], index: 0, kind: input, shape index: {}]
  %s1 = inlined_call_operand.hbm [shape: s32[8,128], index: 1, kind: input, shape index: {}]
  %s2 = inlined_call_operand.vmem [shape: f32[2,128], index: 2, kind: input, shape index: {}]
  %s3 = inlined_call_operand.hbm [shape: f32[1,128], index: 3, kind: output, shape index: {}]
  %s4 = sld [smem:[#allocation0]]
  $region38: #{tpu_custom_call.1} parent=0
    _
  %s6 = ssub.s32 1, %s4
  %s7 = scalar_select 0, %s6, %s4
  $region1: #{tpu_custom_call.1} parent=0
    #allocation3 [shape = 'u8[8192]{0}', space=vmem, size = 0x2000, scoped, tag = 'input window, operand 0, single buffered']
    #allocation4 [shape = 's32[1]{0}', space=sflag, size = 0x4, scoped, tag = 'scoped memory for tpu_custom_call.1']
    #allocation5 [shape = 's32[1]{0}', space=sflag, size = 0x4, scoped, tag = 'scoped memory for tpu_custom_call.1']
    #allocation6 [shape = 'u8[4096]{0}', space=vmem, size = 0x1000, scoped, tag = 'input window, operand 1, single buffered']
    #allocation7 [shape = 's32[1]{0}', space=sflag, size = 0x4, scoped, tag = 'scoped memory for tpu_custom_call.1']
    #allocation8 [shape = 'u8[512]{0}', space=vmem, size = 0x400, scoped, tag = 'output window, operand 0, single buffered']
    %8 = vsyncpa [#allocation4], 0
    %9 = vsyncpa [#allocation7], 0
    %10 = vsyncpa [#allocation5], 0
    // Predicated region
    $region2: #{tpu_custom_call.1} parent=1 // pred_check
      _
    $region3: #{tpu_custom_call.1} parent=1 // pred_check_branch
      %12 = sbr.rel (0) target = $region5
    $region4: #{tpu_custom_call.1} parent=1 // pred_region
      %s13 = sadd.s32 0, 0
      %s15 = ssub.s32 256, 256
      %16 = vsyncadd [#allocation4], %s15
      %s17 = smul.addr %s13, 128
      %s18 = scalar_lea.hbm %s0, %s17
      %s19 = sshll.u32 [#allocation3], 4
      %s20 = int_to_ptr.vmem [resolvable:$true] %s19
      %25 = dma.hbm_to_vmem [thread:$0]  %s18, 256, %s20, [#allocation4], 128, 128, 8
    $region5: #{tpu_custom_call.1} parent=1 // pred_fallthru
      _
    // Predicated region
    $region6: #{tpu_custom_call.1} parent=1 // pred_check
      _
    $region7: #{tpu_custom_call.1} parent=1 // pred_check_branch
      %27 = sbr.rel (0) target = $region9
    $region8: #{tpu_custom_call.1} parent=1 // pred_region
      %s28 = sadd.s32 0, 0
      %s30 = ssub.s32 128, 128
      %31 = vsyncadd [#allocation7], %s30
      %s32 = smul.addr %s28, 128
      %s33 = scalar_lea.hbm %s1, %s32
      %s35 = sshll.u32 [#allocation6], 4
      %s36 = int_to_ptr.vmem [resolvable:$true] %s35
      %38 = dma.hbm_to_vmem [thread:$0]  %s33, 128, %s36, [#allocation7]
    $region9: #{tpu_custom_call.1} parent=1 // pred_fallthru
      _
    // Predicated region
    $region10: #{tpu_custom_call.1} parent=1 // pred_check
      _
    $region11: #{tpu_custom_call.1} parent=1 // pred_check_branch
      %40 = sbr.rel (0) target = $region13
    $region12: #{tpu_custom_call.1} parent=1 // pred_region
      _
    $region13: #{tpu_custom_call.1} parent=1 // pred_fallthru
      _
    // Predicated region
    $region14: #{tpu_custom_call.1} parent=1 // pred_check
      _
    $region15: #{tpu_custom_call.1} parent=1 // pred_check_branch
      %42 = sbr.rel (0) target = $region17
    $region16: #{tpu_custom_call.1} parent=1 // pred_region
      %43 = dma.done [#allocation4], 256
    $region17: #{tpu_custom_call.1} parent=1 // pred_fallthru
      _
    // Predicated region
    $region18: #{tpu_custom_call.1} parent=1 // pred_check
      _
    $region19: #{tpu_custom_call.1} parent=1 // pred_check_branch
      %45 = sbr.rel (0) target = $region21
    $region20: #{tpu_custom_call.1} parent=1 // pred_region
      %46 = dma.done [#allocation7], 128
    $region21: #{tpu_custom_call.1} parent=1 // pred_fallthru
      _
    %s47 = sadd.s32 0, 0
    %s48 = sadd.s32 0, 0
    %p49 = scmp.eq.s32.totalorder 0, 0
    // Predicated region
    $region22: #{tpu_custom_call.1} parent=1 // pred_check
      %p50 = pneg %p49
    $region23: #{tpu_custom_call.1} parent=1 // pred_check_branch
      %52 = sbr.rel (%p50) target = $region25
    $region24: #{tpu_custom_call.1} parent=1 // pred_region
      %53 = vst [vmem:[#allocation2] sm:$0xff] 0.0
    $region25: #{tpu_custom_call.1} parent=1 // pred_fallthru
      _
    %v54 = vld [vmem:[#allocation6] sm:$0xff]
    %v55 = vld [vmem:[%s2] sm:$0x3]
    %v56 = vld [vmem:[#allocation3] sm:$0xff]
    %s57 = scalar_lea.vmem [#allocation3], 8
    %v58 = vld [vmem:[%s57] sm:$0xff]
    %v59 = vmax.f32 %v56, %v58
    %v60 = vsub.f32 %v56, %v59
    %v61 = vmul.f32 %v60, 1.442695
    %v62 = vpow.pop %v61
    %v63 = vsub.f32 %v58, %v59
    %v64 = vmul.f32 %v63, 1.442695
    %v65 = vpow.pop %v64
    %v66 = vadd.f32 %v62, %v65
    %v67 = vlog2.pop %v66
    %v68 = vmul.f32 %v67, 0.6931472
    %vm69 = vcmp.eq.s32.totalorder %v54, 1
    %v70 = vsel %vm69, %v58, %v56
    %v71 = vlaneseq
    %v72 = vshrl.u32 %v71, 7
    %v73 = vsub.s32 1, %v72
    %v74 = vrot.slane %v55, %v73
    %v75 = vlaneseq
    %v76 = vshrl.u32 %v75, 7
    %v77 = vsub.s32 0, %v76
    %v78 = vrot.slane %v55, %v77
    %v79 = vsel %vm69, %v74, %v78
    %v80 = vsub.f32 %v70, %v59
    %v81 = vsub.f32 %v80, %v68
    %v82 = vmul.f32 %v81, 1.442695
    %v83 = vpow.pop %v82
    %v84 = vsub.f32 1.0, %v83
    %v85 = vmul.f32 %v84, %v84
    %v86 = vsub.f32 0.0, %v79
    %v87 = vmul.f32 %v86, %v85
    %v88 = vmul.f32 %v87, %v81
    %s89 = sadd.s32 0, 0
    %s90 = smul.u32 %s89, 1024
    %v91 = vlaneseq
    %v92 = vshrl.u32 %v91, 7
    %v93 = vlaneseq
    %v94 = vand.u32 %v93, 127
    %v95 = vmul.u32 %v92, 128
    %v96 = vstv %s90
    %v97 = vadd.s32 %v96, %v95
    %v98 = vadd.s32 %v97, %v94
    %vm99 = vcmp.lt.s32.totalorder %v98, 8
    %v100 = vsel %vm99, %v88, 0.0
    %v101 = vld [vmem:[#allocation2] sm:$0xff]
    %v102 = vadd.f32 %v101, %v100
    %103 = vst [vmem:[#allocation2] sm:$0xff] %v102
    // Predicated region
    $region26: #{tpu_custom_call.1} parent=1 // pred_check
      %p104 = pneg %p49
    $region27: #{tpu_custom_call.1} parent=1 // pred_check_branch
      %106 = sbr.rel (%p104) target = $region29
    $region28: #{tpu_custom_call.1} parent=1 // pred_region
      %v107 = vld [vmem:[#allocation2] sm:$0xff]
      %108 = vadd.xlane.f32.xlu0 %v107
      %v109 = vpop.xlane.xlu0 %108
      %v110 = vrot.slane %v109, 4
      %v111 = vadd.f32 %v109, %v110
      %v112 = vrot.slane %v111, 2
      %v113 = vadd.f32 %v111, %v112
      %v114 = vrot.slane %v113, 1
      %v115 = vadd.f32 %v113, %v114
      %s116 = vtos %v115
      %v117 = vstv %s116
      %v118 = vadd.f32 %v117, 0.0
      %119 = vst [vmem:[#allocation8] sm:$0x1] %v118
    $region29: #{tpu_custom_call.1} parent=1 // pred_fallthru
      _
    // Predicated region
    $region30: #{tpu_custom_call.1} parent=1 // pred_check
      _
    $region31: #{tpu_custom_call.1} parent=1 // pred_check_branch
      %121 = sbr.rel (0) target = $region33
    $region32: #{tpu_custom_call.1} parent=1 // pred_region
      %s123 = ssub.s32 16, 16
      %124 = vsyncadd [#allocation5], %s123
      %s126 = sshll.u32 [#allocation8], 4
      %s127 = int_to_ptr.vmem [resolvable:$true] %s126
      %129 = dma.vmem_to_hbm [thread:$0]  %s127, 16, %s3, [#allocation5]
    $region33: #{tpu_custom_call.1} parent=1 // pred_fallthru
      _
    // Predicated region
    $region34: #{tpu_custom_call.1} parent=1 // pred_check
      _
    $region35: #{tpu_custom_call.1} parent=1 // pred_check_branch
      %131 = sbr.rel (0) target = $region37
    $region36: #{tpu_custom_call.1} parent=1 // pred_region
      %132 = dma.done [#allocation5], 16
    $region37: #{tpu_custom_call.1} parent=1 // pred_fallthru
      _
    %133 = vsyncpa [#allocation4], 1
    %134 = vsyncpa [#allocation7], 1
    %135 = vsyncpa [#allocation5], 1

</llo_original>
